<compile_context>
chip_gen: v6e
topology: v6e:2x2x1
jax: 0.10.0
libtpu: 0.0.40
codegen_flags: <defaults>
</compile_context>

<pallas_src>
import jax
import jax.numpy as jnp
from jax.experimental import pallas as pl
from jax.experimental.pallas import tpu as pltpu


# ----------------------------------------------------------------------------
# Pallas kernel: ReLU(CLS) @ W^T + b   (the RicModel tail)
# ----------------------------------------------------------------------------
def cls_head_kernel(cls_ref, w_ref, b_ref, o_ref):
    # cls_ref: (TB, D)  f32  CLS-token activations for this batch tile
    # w_ref  : (D, NP)  bf16 classifier weight, pre-transposed + lane-padded
    # b_ref  : (1, NP)  f32  classifier bias, lane-padded
    # o_ref  : (TB, NP) f32  logits
    cls = jnp.maximum(cls_ref[...], 0.0)                 # .relu() in f32 (v5e-safe)
    logits = jnp.dot(cls.astype(jnp.bfloat16), w_ref[...],
                     preferred_element_type=jnp.float32)  # MXU bf16, f32 accumulate
    o_ref[...] = (logits + b_ref[...]).astype(o_ref.dtype)


def ric_head_pallas(last_hidden_state, clf_w, clf_b):
    """last_hidden_state: (B, S, D) f32; clf_w: (n_classes, D); clf_b: (n_classes,)."""
    B, S, D = last_hidden_state.shape
    n_classes = clf_w.shape[0]

    # --- CLS-only slice: the kernel never sees the other S-1 tokens. ---------
    cls = last_hidden_state[:, 0, :]                      # (B, D)

    # --- Lane-dense head: pad n_classes up to a multiple of 128. -------------
    NP = ((n_classes + 127) // 128) * 128
    w_t = jnp.zeros((D, NP), jnp.bfloat16)
    w_t = w_t.at[:, :n_classes].set(clf_w.T.astype(jnp.bfloat16))
    b_p = jnp.zeros((1, NP), jnp.float32)
    b_p = b_p.at[:, :n_classes].set(clf_b.astype(jnp.float32))

    # --- Batch tiling: TB multiple of 8 (sublane), capped at 128 (MXU M). ----
    TB = 128 if B >= 128 else ((B + 7) // 8) * 8
    Bp = ((B + TB - 1) // TB) * TB
    if Bp != B:
        cls = jnp.pad(cls, ((0, Bp - B), (0, 0)))

    cost = pl.CostEstimate(
        flops=2 * Bp * D * NP,
        transcendentals=0,
        bytes_accessed=Bp * D * 4 + D * NP * 2 + Bp * NP * 4,
    )

    out = pl.pallas_call(
        cls_head_kernel,
        out_shape=jax.ShapeDtypeStruct((Bp, NP), jnp.float32),
        grid_spec=pltpu.PrefetchScalarGridSpec(
            num_scalar_prefetch=0,
            grid=(Bp // TB,),
            in_specs=[
                pl.BlockSpec((TB, D), lambda i: (i, 0)),   # batch tile i
                pl.BlockSpec((D, NP), lambda i: (0, 0)),   # weight: resident
                pl.BlockSpec((1, NP), lambda i: (0, 0)),   # bias:   resident
            ],
            out_specs=pl.BlockSpec((TB, NP), lambda i: (i, 0)),
        ),
        compiler_params=pltpu.CompilerParams(
            dimension_semantics=("parallel",)),             # dual-TC on v7x
        cost_estimate=cost,
    )(cls, w_t, b_p)

    return out[:B, :n_classes]


# ----------------------------------------------------------------------------
# Deterministic synthetic backbone stub (plain-JAX glue).
# Produces `last_hidden_state` of shape (B, S, 768).
# ----------------------------------------------------------------------------
HIDDEN = 768
PATCH = 8


def init_params(key, in_ch, img, n_classes):
    kp, kc, kpos, kw, kb = jax.random.split(key, 5)
    n_patches = (img // PATCH) * (img // PATCH)
    patch_dim = in_ch * PATCH * PATCH
    params = {
        "patch_w": jax.random.normal(kp, (patch_dim, HIDDEN), jnp.float32) * 0.02,
        "cls_tok": jax.random.normal(kc, (1, 1, HIDDEN), jnp.float32) * 0.02,
        "pos_emb": jax.random.normal(kpos, (1, n_patches + 1, HIDDEN), jnp.float32) * 0.02,
        # torch.nn.Linear(768, n_classes): weight (n_classes, 768), bias (n_classes,)
        "clf_w": jax.random.normal(kw, (n_classes, HIDDEN), jnp.float32) * 0.02,
        "clf_b": jax.random.normal(kb, (n_classes,), jnp.float32) * 0.02,
    }
    return params


def backbone_stub(x_nchw, params):
    # x_nchw: (B, C, H, W) -> patches -> linear embed -> prepend CLS -> +pos
    B, C, H, W = x_nchw.shape
    gh, gw = H // PATCH, W // PATCH
    patches = x_nchw.reshape(B, C, gh, PATCH, gw, PATCH)
    patches = patches.transpose(0, 2, 4, 1, 3, 5).reshape(B, gh * gw, C * PATCH * PATCH)
    tok = jnp.tanh(patches @ params["patch_w"])                     # (B, N, 768)
    cls = jnp.broadcast_to(params["cls_tok"], (B, 1, HIDDEN))
    hs = jnp.concatenate([cls, tok], axis=1) + params["pos_emb"]    # (B, N+1, 768)
    return hs  # "last_hidden_state"


def ric_model_forward(x_nchw, params):
    last_hidden_state = backbone_stub(x_nchw, params)
    return ric_head_pallas(last_hidden_state, params["clf_w"], params["clf_b"])


# ----------------------------------------------------------------------------
# Reference (pure JAX, f32) for a sanity check of the Pallas head.
# ----------------------------------------------------------------------------
def ric_model_ref(x_nchw, params):
    hs = backbone_stub(x_nchw, params)
    cls = jnp.maximum(hs[:, 0], 0.0)
    return cls @ params["clf_w"].T + params["clf_b"]


if __name__ == "__main__":
    key = jax.random.PRNGKey(0)
    kx, kparams = jax.random.split(key)

    B, C, IMG = 2, 3, 16
    N_CLASSES = 16

    x = jax.random.normal(kx, (B, C, IMG, IMG), jnp.float32)   # NCHW, like PyTorch
    params = init_params(kparams, C, IMG, N_CLASSES)

    out = jax.jit(ric_model_forward)(x, params)
    out = jax.block_until_ready(out)

    ref = ric_model_ref(x, params)
    assert out.shape == (B, N_CLASSES)
    # bf16 MXU inputs (f32 accumulation) -> loosened tolerance vs. pure-f32 ref.
    assert jnp.allclose(out, ref, atol=2e-2, rtol=2e-2)

    print("KERNEL_OK")
</pallas_src>

<mosaic_0001>
module attributes {stable_mosaic.version = 11 : i64} {
  func.func @cls_head_kernel(%arg0: i32, %arg1: memref<8x768xf32, #tpu.memory_space<vmem>>, %arg2: memref<768x128xbf16, #tpu.memory_space<vmem>>, %arg3: memref<1x128xf32, #tpu.memory_space<vmem>>, %arg4: memref<8x128xf32, #tpu.memory_space<vmem>>) attributes {dimension_semantics = [#tpu.dimension_semantics<parallel>], iteration_bounds = array<i64: 1>, scalar_prefetch = 0 : i64, scratch_operands = 0 : i64, tpu.core_type = #tpu.core_type<tc>, window_params = [{transform_indices = @transform_0, window_bounds = array<i64: 8, 768>}, {pipeline_mode = #tpu.pipeline_mode<synchronous>, transform_indices = @transform_1, window_bounds = array<i64: 768, 128>}, {pipeline_mode = #tpu.pipeline_mode<synchronous>, transform_indices = @transform_2, window_bounds = array<i64: 1, 128>}, {transform_indices = @transform_3, window_bounds = array<i64: 8, 128>}]} {
    %c0 = arith.constant 0 : index
    %c0_0 = arith.constant 0 : index
    %0 = vector.load %arg1[%c0, %c0_0] : memref<8x768xf32, #tpu.memory_space<vmem>>, vector<8x768xf32>
    %cst = arith.constant 0.000000e+00 : f32
    %1 = vector.broadcast %cst : f32 to vector<8x768xf32>
    %2 = arith.maximumf %0, %1 : vector<8x768xf32>
    %3 = arith.truncf %2 : vector<8x768xf32> to vector<8x768xbf16>
    %c0_1 = arith.constant 0 : index
    %c0_2 = arith.constant 0 : index
    %4 = vector.load %arg2[%c0_1, %c0_2] : memref<768x128xbf16, #tpu.memory_space<vmem>>, vector<768x128xbf16>
    %cst_3 = arith.constant dense<0.000000e+00> : vector<8x128xf32>
    %5 = tpu.matmul %3, %4, %cst_3 {dimension_numbers = #tpu.dot_dimension_numbers<[1], [0], [0], [1], [0, 0, 1, 1], [], []>} : vector<8x768xbf16>, vector<768x128xbf16>, vector<8x128xf32> -> vector<8x128xf32>
    %c0_4 = arith.constant 0 : index
    %c0_5 = arith.constant 0 : index
    %6 = vector.load %arg3[%c0_4, %c0_5] : memref<1x128xf32, #tpu.memory_space<vmem>>, vector<1x128xf32>
    %7 = vector.broadcast %6 : vector<1x128xf32> to vector<8x128xf32>
    %8 = arith.addf %5, %7 : vector<8x128xf32>
    %c0_6 = arith.constant 0 : index
    %c0_7 = arith.constant 0 : index
    %9 = vector.load %arg4[%c0_6, %c0_7] : memref<8x128xf32, #tpu.memory_space<vmem>>, vector<8x128xf32>
    tpu.vector_store %arg4[%c0_6, %c0_7], %8 {strides = array<i32>} : memref<8x128xf32, #tpu.memory_space<vmem>>, vector<8x128xf32>,
    return
  }
  func.func @transform_0(%arg0: i32) -> (i32, i32) {
    %c0_i32 = arith.constant 0 : i32
    %c0_i32_0 = arith.constant 0 : i32
    return %arg0, %c0_i32 : i32, i32
  }
  func.func @transform_1(%arg0: i32) -> (i32, i32) {
    %c0_i32 = arith.constant 0 : i32
    %c0_i32_0 = arith.constant 0 : i32
    %c0_i32_1 = arith.constant 0 : i32
    return %c0_i32, %c0_i32_0 : i32, i32
  }
  func.func @transform_2(%arg0: i32) -> (i32, i32) {
    %c0_i32 = arith.constant 0 : i32
    %c0_i32_0 = arith.constant 0 : i32
    %c0_i32_1 = arith.constant 0 : i32
    return %c0_i32, %c0_i32_0 : i32, i32
  }
  func.func @transform_3(%arg0: i32) -> (i32, i32) {
    %c0_i32 = arith.constant 0 : i32
    %c0_i32_0 = arith.constant 0 : i32
    return %arg0, %c0_i32 : i32, i32
  }
}

</mosaic_0001>

<llo_original>
// kernel: ric_model_forward.1
$region0: #{ric_model_forward.1}
  #allocation0 [shape = 'u32[]', space=smem, size = 0x4, offset = 0x4, fixed_abs, tag = 'smem constant byte address 0x4 - core index']
  #allocation1 [shape = 'u32[144,128]{1,0:T(1,128)}', space=vmem, size = 0x12000, scoped, tag = 'internal scratch']
  %s0 = inlined_call_operand.vmem [shape: f32[8,768], index: 0, kind: input, shape index: {}]
  %s1 = inlined_call_operand.vmem [shape: bf16[768,128], index: 1, kind: input, shape index: {}]
  %s2 = inlined_call_operand.vmem [shape: f32[1,128], index: 2, kind: input, shape index: {}]
  %s3 = inlined_call_operand.vmem [shape: f32[8,128], index: 3, kind: output, shape index: {}]
  %s4 = sld [smem:[#allocation0]]
  $region22: #{ric_model_forward.1} parent=0
    _
  %s6 = ssub.s32 1, %s4
  %s7 = scalar_select 0, %s6, %s4
  // Predicated region
  $region2: #{ric_model_forward.1} parent=0 // pred_check
    _
  $region3: #{ric_model_forward.1} parent=0 // pred_check_branch
    %9 = sbr.rel (0) target = $region5
  $region4: #{ric_model_forward.1} parent=0 // pred_region
    _
  $region5: #{ric_model_forward.1} parent=0 // pred_fallthru
    _
  // Predicated region
  $region6: #{ric_model_forward.1} parent=0 // pred_check
    _
  $region7: #{ric_model_forward.1} parent=0 // pred_check_branch
    %11 = sbr.rel (0) target = $region9
  $region8: #{ric_model_forward.1} parent=0 // pred_region
    _
  $region9: #{ric_model_forward.1} parent=0 // pred_fallthru
    _
  // Predicated region
  $region10: #{ric_model_forward.1} parent=0 // pred_check
    _
  $region11: #{ric_model_forward.1} parent=0 // pred_check_branch
    %13 = sbr.rel (0) target = $region13
  $region12: #{ric_model_forward.1} parent=0 // pred_region
    _
  $region13: #{ric_model_forward.1} parent=0 // pred_fallthru
    _
  %v15 = vld [vmem:[%s0] sm:$0xff]
  %v16 = vld [vmem:[%s0 + $0x8] sm:$0xff]
  %v17 = vld [vmem:[%s0 + $0x10] sm:$0xff]
  %v18 = vld [vmem:[%s0 + $0x18] sm:$0xff]
  %v19 = vld [vmem:[%s0 + $0x20] sm:$0xff]
  %v20 = vld [vmem:[%s0 + $0x28] sm:$0xff]
  %v21 = vmax.f32 %v15, 0.0
  %v22 = vmax.f32 %v16, 0.0
  %v23 = vmax.f32 %v17, 0.0
  %v24 = vmax.f32 %v18, 0.0
  %v25 = vmax.f32 %v19, 0.0
  %v26 = vmax.f32 %v20, 0.0
  %v27 = vpack.c.bf16 %v21, %v21
  %v28 = vpack.c.bf16 %v22, %v22
  %v29 = vpack.c.bf16 %v23, %v23
  %v30 = vpack.c.bf16 %v24, %v24
  %v31 = vpack.c.bf16 %v25, %v25
  %v32 = vpack.c.bf16 %v26, %v26
  %v33 = vld [vmem:[%s1] sm:$0xf]
  %v34 = vld [vmem:[%s1 + $0x4] sm:$0xf]
  %v35 = vld [vmem:[%s1 + $0x8] sm:$0xf]
  %v36 = vld [vmem:[%s1 + $0xc] sm:$0xf]
  %v37 = vld [vmem:[%s1 + $0x10] sm:$0xf]
  %v38 = vld [vmem:[%s1 + $0x14] sm:$0xf]
  %v39 = vld [vmem:[%s1 + $0x18] sm:$0xf]
  %v40 = vld [vmem:[%s1 + $0x1c] sm:$0xf]
  %v41 = vld [vmem:[%s1 + $0x20] sm:$0xf]
  %v42 = vld [vmem:[%s1 + $0x24] sm:$0xf]
  %v43 = vld [vmem:[%s1 + $0x28] sm:$0xf]
  %v44 = vld [vmem:[%s1 + $0x2c] sm:$0xf]
  %v45 = vld [vmem:[%s1 + $0x30] sm:$0xf]
  %v46 = vld [vmem:[%s1 + $0x34] sm:$0xf]
  %v47 = vld [vmem:[%s1 + $0x38] sm:$0xf]
  %v48 = vld [vmem:[%s1 + $0x3c] sm:$0xf]
  %v49 = vld [vmem:[%s1 + $0x40] sm:$0xf]
  %v50 = vld [vmem:[%s1 + $0x44] sm:$0xf]
  %v51 = vld [vmem:[%s1 + $0x48] sm:$0xf]
  %v52 = vld [vmem:[%s1 + $0x4c] sm:$0xf]
  %v53 = vld [vmem:[%s1 + $0x50] sm:$0xf]
  %v54 = vld [vmem:[%s1 + $0x54] sm:$0xf]
  %v55 = vld [vmem:[%s1 + $0x58] sm:$0xf]
  %v56 = vld [vmem:[%s1 + $0x5c] sm:$0xf]
  %v57 = vld [vmem:[%s1 + $0x60] sm:$0xf]
  %v58 = vld [vmem:[%s1 + $0x64] sm:$0xf]
  %v59 = vld [vmem:[%s1 + $0x68] sm:$0xf]
  %v60 = vld [vmem:[%s1 + $0x6c] sm:$0xf]
  %v61 = vld [vmem:[%s1 + $0x70] sm:$0xf]
  %v62 = vld [vmem:[%s1 + $0x74] sm:$0xf]
  %v63 = vld [vmem:[%s1 + $0x78] sm:$0xf]
  %v64 = vld [vmem:[%s1 + $0x7c] sm:$0xf]
  %v65 = vld [vmem:[%s1 + $0x80] sm:$0xf]
  %v66 = vld [vmem:[%s1 + $0x84] sm:$0xf]
  %v67 = vld [vmem:[%s1 + $0x88] sm:$0xf]
  %v68 = vld [vmem:[%s1 + $0x8c] sm:$0xf]
  %v69 = vld [vmem:[%s1 + $0x90] sm:$0xf]
  %v70 = vld [vmem:[%s1 + $0x94] sm:$0xf]
  %v71 = vld [vmem:[%s1 + $0x98] sm:$0xf]
  %v72 = vld [vmem:[%s1 + $0x9c] sm:$0xf]
  %v73 = vld [vmem:[%s1 + $0xa0] sm:$0xf]
  %v74 = vld [vmem:[%s1 + $0xa4] sm:$0xf]
  %v75 = vld [vmem:[%s1 + $0xa8] sm:$0xf]
  %v76 = vld [vmem:[%s1 + $0xac] sm:$0xf]
  %v77 = vld [vmem:[%s1 + $0xb0] sm:$0xf]
  %v78 = vld [vmem:[%s1 + $0xb4] sm:$0xf]
  %v79 = vld [vmem:[%s1 + $0xb8] sm:$0xf]
  %v80 = vld [vmem:[%s1 + $0xbc] sm:$0xf]
  %v81 = vld [vmem:[%s1 + $0xc0] sm:$0xf]
  %v82 = vld [vmem:[%s1 + $0xc4] sm:$0xf]
  %v83 = vld [vmem:[%s1 + $0xc8] sm:$0xf]
  %v84 = vld [vmem:[%s1 + $0xcc] sm:$0xf]
  %v85 = vld [vmem:[%s1 + $0xd0] sm:$0xf]
  %v86 = vld [vmem:[%s1 + $0xd4] sm:$0xf]
  %v87 = vld [vmem:[%s1 + $0xd8] sm:$0xf]
  %v88 = vld [vmem:[%s1 + $0xdc] sm:$0xf]
  %v89 = vld [vmem:[%s1 + $0xe0] sm:$0xf]
  %v90 = vld [vmem:[%s1 + $0xe4] sm:$0xf]
  %v91 = vld [vmem:[%s1 + $0xe8] sm:$0xf]
  %v92 = vld [vmem:[%s1 + $0xec] sm:$0xf]
  %v93 = vld [vmem:[%s1 + $0xf0] sm:$0xf]
  %v94 = vld [vmem:[%s1 + $0xf4] sm:$0xf]
  %v95 = vld [vmem:[%s1 + $0xf8] sm:$0xf]
  %v96 = vld [vmem:[%s1 + $0xfc] sm:$0xf]
  %v97 = vld [vmem:[%s1 + $0x100] sm:$0xf]
  %v98 = vld [vmem:[%s1 + $0x104] sm:$0xf]
  %v99 = vld [vmem:[%s1 + $0x108] sm:$0xf]
  %v100 = vld [vmem:[%s1 + $0x10c] sm:$0xf]
  %v101 = vld [vmem:[%s1 + $0x110] sm:$0xf]
  %v102 = vld [vmem:[%s1 + $0x114] sm:$0xf]
  %v103 = vld [vmem:[%s1 + $0x118] sm:$0xf]
  %v104 = vld [vmem:[%s1 + $0x11c] sm:$0xf]
  %v105 = vld [vmem:[%s1 + $0x120] sm:$0xf]
  %v106 = vld [vmem:[%s1 + $0x124] sm:$0xf]
  %v107 = vld [vmem:[%s1 + $0x128] sm:$0xf]
  %v108 = vld [vmem:[%s1 + $0x12c] sm:$0xf]
  %v109 = vld [vmem:[%s1 + $0x130] sm:$0xf]
  %v110 = vld [vmem:[%s1 + $0x134] sm:$0xf]
  %v111 = vld [vmem:[%s1 + $0x138] sm:$0xf]
  %v112 = vld [vmem:[%s1 + $0x13c] sm:$0xf]
  %v113 = vld [vmem:[%s1 + $0x140] sm:$0xf]
  %v114 = vld [vmem:[%s1 + $0x144] sm:$0xf]
  %v115 = vld [vmem:[%s1 + $0x148] sm:$0xf]
  %v116 = vld [vmem:[%s1 + $0x14c] sm:$0xf]
  %v117 = vld [vmem:[%s1 + $0x150] sm:$0xf]
  %v118 = vld [vmem:[%s1 + $0x154] sm:$0xf]
  %v119 = vld [vmem:[%s1 + $0x158] sm:$0xf]
  %v120 = vld [vmem:[%s1 + $0x15c] sm:$0xf]
  %v121 = vld [vmem:[%s1 + $0x160] sm:$0xf]
  %v122 = vld [vmem:[%s1 + $0x164] sm:$0xf]
  %v123 = vld [vmem:[%s1 + $0x168] sm:$0xf]
  %v124 = vld [vmem:[%s1 + $0x16c] sm:$0xf]
  %v125 = vld [vmem:[%s1 + $0x170] sm:$0xf]
  %v126 = vld [vmem:[%s1 + $0x174] sm:$0xf]
  %v127 = vld [vmem:[%s1 + $0x178] sm:$0xf]
  %v128 = vld [vmem:[%s1 + $0x17c] sm:$0xf]
  %v129 = vld [vmem:[%s2] sm:$0x1]
  %v131 = vlaneseq
  %v132 = vshrl.u32 %v131, 7
  %v133 = vsub.s32 0, %v132
  %v134 = vrot.slane %v129, %v133
  %v232 = vunpack.c.l.b16 %v33
  %v233 = vunpack.c.l.b16 %v34
  %v234 = vunpack.c.l.b16 %v35
  %v235 = vunpack.c.l.b16 %v36
  %v236 = vunpack.c.l.b16 %v37
  %v237 = vunpack.c.l.b16 %v38
  %v238 = vunpack.c.l.b16 %v39
  %v239 = vunpack.c.l.b16 %v40
  %v240 = vunpack.c.l.b16 %v41
  %v241 = vunpack.c.l.b16 %v42
  %v242 = vunpack.c.l.b16 %v43
  %v243 = vunpack.c.l.b16 %v44
  %v244 = vunpack.c.l.b16 %v45
  %v245 = vunpack.c.l.b16 %v46
  %v246 = vunpack.c.l.b16 %v47
  %v247 = vunpack.c.l.b16 %v48
  %v248 = vunpack.c.l.b16 %v49
  %v249 = vunpack.c.l.b16 %v50
  %v250 = vunpack.c.l.b16 %v51
  %v251 = vunpack.c.l.b16 %v52
  %v252 = vunpack.c.l.b16 %v53
  %v253 = vunpack.c.l.b16 %v54
  %v254 = vunpack.c.l.b16 %v55
  %v255 = vunpack.c.l.b16 %v56
  %v256 = vunpack.c.l.b16 %v57
  %v257 = vunpack.c.l.b16 %v58
  %v258 = vunpack.c.l.b16 %v59
  %v259 = vunpack.c.l.b16 %v60
  %v260 = vunpack.c.l.b16 %v61
  %v261 = vunpack.c.l.b16 %v62
  %v262 = vunpack.c.l.b16 %v63
  %v263 = vunpack.c.l.b16 %v64
  %v264 = vunpack.c.l.b16 %v65
  %v265 = vunpack.c.l.b16 %v66
  %v266 = vunpack.c.l.b16 %v67
  %v267 = vunpack.c.l.b16 %v68
  %v268 = vunpack.c.l.b16 %v69
  %v269 = vunpack.c.l.b16 %v70
  %v270 = vunpack.c.l.b16 %v71
  %v271 = vunpack.c.l.b16 %v72
  %v272 = vunpack.c.l.b16 %v73
  %v273 = vunpack.c.l.b16 %v74
  %v274 = vunpack.c.l.b16 %v75
  %v275 = vunpack.c.l.b16 %v76
  %v276 = vunpack.c.l.b16 %v77
  %v277 = vunpack.c.l.b16 %v78
  %v278 = vunpack.c.l.b16 %v79
  %v279 = vunpack.c.l.b16 %v80
  %v280 = vunpack.c.l.b16 %v81
  %v281 = vunpack.c.l.b16 %v82
  %v282 = vunpack.c.l.b16 %v83
  %v283 = vunpack.c.l.b16 %v84
  %v284 = vunpack.c.l.b16 %v85
  %v285 = vunpack.c.l.b16 %v86
  %v286 = vunpack.c.l.b16 %v87
  %v287 = vunpack.c.l.b16 %v88
  %v288 = vunpack.c.l.b16 %v89
  %v289 = vunpack.c.l.b16 %v90
  %v290 = vunpack.c.l.b16 %v91
  %v291 = vunpack.c.l.b16 %v92
  %v292 = vunpack.c.l.b16 %v93
  %v293 = vunpack.c.l.b16 %v94
  %v294 = vunpack.c.l.b16 %v95
  %v295 = vunpack.c.l.b16 %v96
  %v296 = vunpack.c.l.b16 %v97
  %v297 = vunpack.c.l.b16 %v98
  %v298 = vunpack.c.l.b16 %v99
  %v299 = vunpack.c.l.b16 %v100
  %v300 = vunpack.c.l.b16 %v101
  %v301 = vunpack.c.l.b16 %v102
  %v302 = vunpack.c.l.b16 %v103
  %v303 = vunpack.c.l.b16 %v104
  %v304 = vunpack.c.l.b16 %v105
  %v305 = vunpack.c.l.b16 %v106
  %v306 = vunpack.c.l.b16 %v107
  %v307 = vunpack.c.l.b16 %v108
  %v308 = vunpack.c.l.b16 %v109
  %v309 = vunpack.c.l.b16 %v110
  %v310 = vunpack.c.l.b16 %v111
  %v311 = vunpack.c.l.b16 %v112
  %v312 = vunpack.c.l.b16 %v113
  %v313 = vunpack.c.l.b16 %v114
  %v314 = vunpack.c.l.b16 %v115
  %v315 = vunpack.c.l.b16 %v116
  %v316 = vunpack.c.l.b16 %v117
  %v317 = vunpack.c.l.b16 %v118
  %v318 = vunpack.c.l.b16 %v119
  %v319 = vunpack.c.l.b16 %v120
  %v320 = vunpack.c.l.b16 %v121
  %v321 = vunpack.c.l.b16 %v122
  %v322 = vunpack.c.l.b16 %v123
  %v323 = vunpack.c.l.b16 %v124
  %v324 = vunpack.c.l.b16 %v125
  %v325 = vunpack.c.l.b16 %v126
  %v326 = vunpack.c.l.b16 %v127
  %v327 = vunpack.c.l.b16 %v128
  %v328 = vpack.c.b16 %v233, %v232
  %v329 = vpack.c.b16 %v235, %v234
  %v330 = vpack.c.b16 %v237, %v236
  %v331 = vpack.c.b16 %v239, %v238
  %v332 = vpack.c.b16 %v241, %v240
  %v333 = vpack.c.b16 %v243, %v242
  %v334 = vpack.c.b16 %v245, %v244
  %v335 = vpack.c.b16 %v247, %v246
  %v336 = vpack.c.b16 %v249, %v248
  %v337 = vpack.c.b16 %v251, %v250
  %v338 = vpack.c.b16 %v253, %v252
  %v339 = vpack.c.b16 %v255, %v254
  %v340 = vpack.c.b16 %v257, %v256
  %v341 = vpack.c.b16 %v259, %v258
  %v342 = vpack.c.b16 %v261, %v260
  %v343 = vpack.c.b16 %v263, %v262
  %v344 = vpack.c.b16 %v265, %v264
  %v345 = vpack.c.b16 %v267, %v266
  %v346 = vpack.c.b16 %v269, %v268
  %v347 = vpack.c.b16 %v271, %v270
  %v348 = vpack.c.b16 %v273, %v272
  %v349 = vpack.c.b16 %v275, %v274
  %v350 = vpack.c.b16 %v277, %v276
  %v351 = vpack.c.b16 %v279, %v278
  %v352 = vpack.c.b16 %v281, %v280
  %v353 = vpack.c.b16 %v283, %v282
  %v354 = vpack.c.b16 %v285, %v284
  %v355 = vpack.c.b16 %v287, %v286
  %v356 = vpack.c.b16 %v289, %v288
  %v357 = vpack.c.b16 %v291, %v290
  %v358 = vpack.c.b16 %v293, %v292
  %v359 = vpack.c.b16 %v295, %v294
  %v360 = vpack.c.b16 %v297, %v296
  %v361 = vpack.c.b16 %v299, %v298
  %v362 = vpack.c.b16 %v301, %v300
  %v363 = vpack.c.b16 %v303, %v302
  %v364 = vpack.c.b16 %v305, %v304
  %v365 = vpack.c.b16 %v307, %v306
  %v366 = vpack.c.b16 %v309, %v308
  %v367 = vpack.c.b16 %v311, %v310
  %v368 = vpack.c.b16 %v313, %v312
  %v369 = vpack.c.b16 %v315, %v314
  %v370 = vpack.c.b16 %v317, %v316
  %v371 = vpack.c.b16 %v319, %v318
  %v372 = vpack.c.b16 %v321, %v320
  %v373 = vpack.c.b16 %v323, %v322
  %v374 = vpack.c.b16 %v325, %v324
  %v375 = vpack.c.b16 %v327, %v326
  %424 = vmatprep.subr.bf16.mxu0 0
  %425 = vmatpush1.bf16.msra.mxu0 %v335
  %426 = vmatprep.subr.bf16.mxu0 0
  %427 = vmatpush1.bf16.msra.mxu0 %v334
  %428 = vmatprep.subr.bf16.mxu0 0
  %429 = vmatpush1.bf16.msra.mxu0 %v333
  %430 = vmatprep.subr.bf16.mxu0 0
  %431 = vmatpush1.bf16.msra.mxu0 %v332
  %432 = vmatprep.subr.bf16.mxu0 0
  %433 = vmatpush1.bf16.msra.mxu0 %v331
  %434 = vmatprep.subr.bf16.mxu0 0
  %435 = vmatpush1.bf16.msra.mxu0 %v330
  %436 = vmatprep.subr.bf16.mxu0 0
  %437 = vmatpush1.bf16.msra.mxu0 %v329
  %438 = vmatprep.subr.bf16.mxu0 0
  %439 = vmatpush1.bf16.msra.mxu0 %v328
  %440 = vmatprep.subr.bf16.mxu0 0
  %441 = vmatpush2.bf16.msra.mxu0 %v343
  %442 = vmatprep.subr.bf16.mxu0 0
  %443 = vmatpush2.bf16.msra.mxu0 %v342
  %444 = vmatprep.subr.bf16.mxu0 0
  %445 = vmatpush2.bf16.msra.mxu0 %v341
  %446 = vmatprep.subr.bf16.mxu0 0
  %447 = vmatpush2.bf16.msra.mxu0 %v340
  %448 = vmatprep.subr.bf16.mxu0 0
  %449 = vmatpush2.bf16.msra.mxu0 %v339
  %450 = vmatprep.subr.bf16.mxu0 0
  %451 = vmatpush2.bf16.msra.mxu0 %v338
  %452 = vmatprep.subr.bf16.mxu0 0
  %453 = vmatpush2.bf16.msra.mxu0 %v337
  %454 = vmatprep.subr.bf16.mxu0 0
  %455 = vmatpush2.bf16.msra.mxu0 %v336
  %456 = vmatprep.mubr.bf16.mxu0 %v28
  %457 = vmatmul.mubr.bf16.gmra.mxu0 %v27
  %v458 = vpop.f32.mrf.mxu0
  %v459 = vadd.f32 %v134, %v458
  %v460 = vpop.f32.mrf.mxu0
  %v461 = vpop.f32.mrf.mxu0
  %v462 = vpop.f32.mrf.mxu0
  %463 = vdwg.mxu0
  %464 = vmatprep.subr.bf16.mxu0 0
  %465 = vmatpush1.bf16.msra.mxu0 %v351
  %466 = vmatprep.subr.bf16.mxu0 0
  %467 = vmatpush1.bf16.msra.mxu0 %v350
  %468 = vmatprep.subr.bf16.mxu0 0
  %469 = vmatpush1.bf16.msra.mxu0 %v349
  %470 = vmatprep.subr.bf16.mxu0 0
  %471 = vmatpush1.bf16.msra.mxu0 %v348
  %472 = vmatprep.subr.bf16.mxu0 0
  %473 = vmatpush1.bf16.msra.mxu0 %v347
  %474 = vmatprep.subr.bf16.mxu0 0
  %475 = vmatpush1.bf16.msra.mxu0 %v346
  %476 = vmatprep.subr.bf16.mxu0 0
  %477 = vmatpush1.bf16.msra.mxu0 %v345
  %478 = vmatprep.subr.bf16.mxu0 0
  %479 = vmatpush1.bf16.msra.mxu0 %v344
  %480 = vmatprep.subr.bf16.mxu0 0
  %481 = vmatpush2.bf16.msra.mxu0 %v359
  %482 = vmatprep.subr.bf16.mxu0 0
  %483 = vmatpush2.bf16.msra.mxu0 %v358
  %484 = vmatprep.subr.bf16.mxu0 0
  %485 = vmatpush2.bf16.msra.mxu0 %v357
  %486 = vmatprep.subr.bf16.mxu0 0
  %487 = vmatpush2.bf16.msra.mxu0 %v356
  %488 = vmatprep.subr.bf16.mxu0 0
  %489 = vmatpush2.bf16.msra.mxu0 %v355
  %490 = vmatprep.subr.bf16.mxu0 0
  %491 = vmatpush2.bf16.msra.mxu0 %v354
  %492 = vmatprep.subr.bf16.mxu0 0
  %493 = vmatpush2.bf16.msra.mxu0 %v353
  %494 = vmatprep.subr.bf16.mxu0 0
  %495 = vmatpush2.bf16.msra.mxu0 %v352
  %496 = vmatprep.mubr.bf16.mxu0 %v30
  %497 = vmatmul.mubr.bf16.gmra.mxu0 %v29
  %v498 = vpop.f32.mrf.mxu0
  %v499 = vadd.f32 %v459, %v498
  %v500 = vpop.f32.mrf.mxu0
  %v501 = vpop.f32.mrf.mxu0
  %v502 = vpop.f32.mrf.mxu0
  %503 = vdwg.mxu0
  %504 = vmatprep.subr.bf16.mxu0 0
  %505 = vmatpush1.bf16.msra.mxu0 %v367
  %506 = vmatprep.subr.bf16.mxu0 0
  %507 = vmatpush1.bf16.msra.mxu0 %v366
  %508 = vmatprep.subr.bf16.mxu0 0
  %509 = vmatpush1.bf16.msra.mxu0 %v365
  %510 = vmatprep.subr.bf16.mxu0 0
  %511 = vmatpush1.bf16.msra.mxu0 %v364
  %512 = vmatprep.subr.bf16.mxu0 0
  %513 = vmatpush1.bf16.msra.mxu0 %v363
  %514 = vmatprep.subr.bf16.mxu0 0
  %515 = vmatpush1.bf16.msra.mxu0 %v362
  %516 = vmatprep.subr.bf16.mxu0 0
  %517 = vmatpush1.bf16.msra.mxu0 %v361
  %518 = vmatprep.subr.bf16.mxu0 0
  %519 = vmatpush1.bf16.msra.mxu0 %v360
  %520 = vmatprep.subr.bf16.mxu0 0
  %521 = vmatpush2.bf16.msra.mxu0 %v375
  %522 = vmatprep.subr.bf16.mxu0 0
  %523 = vmatpush2.bf16.msra.mxu0 %v374
  %524 = vmatprep.subr.bf16.mxu0 0
  %525 = vmatpush2.bf16.msra.mxu0 %v373
  %526 = vmatprep.subr.bf16.mxu0 0
  %527 = vmatpush2.bf16.msra.mxu0 %v372
  %528 = vmatprep.subr.bf16.mxu0 0
  %529 = vmatpush2.bf16.msra.mxu0 %v371
  %530 = vmatprep.subr.bf16.mxu0 0
  %531 = vmatpush2.bf16.msra.mxu0 %v370
  %532 = vmatprep.subr.bf16.mxu0 0
  %533 = vmatpush2.bf16.msra.mxu0 %v369
  %534 = vmatprep.subr.bf16.mxu0 0
  %535 = vmatpush2.bf16.msra.mxu0 %v368
  %536 = vmatprep.mubr.bf16.mxu0 %v32
  %537 = vmatmul.mubr.bf16.gmra.mxu0 %v31
  %v538 = vpop.f32.mrf.mxu0
  %v539 = vadd.f32 %v499, %v538
  %v540 = vpop.f32.mrf.mxu0
  %v541 = vpop.f32.mrf.mxu0
  %v542 = vpop.f32.mrf.mxu0
  %543 = vdwg.mxu0
  %544 = vst [vmem:[%s3] sm:$0xff] %v539
  // Predicated region
  $region14: #{ric_model_forward.1} parent=0 // pred_check
    _
  $region15: #{ric_model_forward.1} parent=0 // pred_check_branch
    %546 = sbr.rel (0) target = $region17
  $region16: #{ric_model_forward.1} parent=0 // pred_region
    _
  $region17: #{ric_model_forward.1} parent=0 // pred_fallthru
    _
  // Predicated region
  $region18: #{ric_model_forward.1} parent=0 // pred_check
    _
  $region19: #{ric_model_forward.1} parent=0 // pred_check_branch
    %548 = sbr.rel (0) target = $region21
  $region20: #{ric_model_forward.1} parent=0 // pred_region
    _
  $region21: #{ric_model_forward.1} parent=0 // pred_fallthru
    _

</llo_original>
